<compile_context>
chip_gen: v7x
topology: tpu7x:2x2x1
jax: 0.10.0
libtpu: 0.0.40
codegen_flags: <defaults>
</compile_context>

<pallas_src>
import jax
import jax.numpy as jnp
from jax.experimental import pallas as pl
from jax.experimental.pallas import tpu as pltpu


def gcn_mlp_kernel(a_ref, x_ref,
                   w1_ref, b1_ref,
                   w2_ref, b2_ref,
                   w3_ref, b3_ref,
                   w4_ref, b4_ref,
                   out_ref):
    """Fused GCNConv -> ReLU -> 3x Linear(+ReLU) -> log_softmax for one row tile."""
    f_in = x_ref.shape[-1]
    f_out = w1_ref.shape[-1]
    a = a_ref[...]                                   # (TM, N) bf16 adjacency rows

    # GCNConv: choose the matmul order with the smaller inner width (as PyG does).
    if f_in <= f_out:
        # aggregate first: (A @ X) @ W1   -- N^2 * F_in MACs
        agg = jnp.dot(a, x_ref[...].astype(a.dtype),
                      preferred_element_type=jnp.float32)           # (TM, F_in) f32
        h = jnp.dot(agg, w1_ref[...], preferred_element_type=jnp.float32)
    else:
        # transform first: A @ (X @ W1)   -- N^2 * F_out MACs
        xw = jnp.dot(x_ref[...], w1_ref[...], preferred_element_type=jnp.float32)
        h = jnp.dot(a, xw.astype(a.dtype), preferred_element_type=jnp.float32)

    # Bias after propagation (PyG convention) + ReLU, all f32 elementwise.
    h = jnp.maximum(h + b1_ref[...], 0.0)
    # lin1
    h = jnp.maximum(jnp.dot(h, w2_ref[...], preferred_element_type=jnp.float32)
                    + b2_ref[...], 0.0)
    # lin2
    h = jnp.maximum(jnp.dot(h, w3_ref[...], preferred_element_type=jnp.float32)
                    + b3_ref[...], 0.0)
    # lin3 (classes padded to 128 lanes; pad columns carry bias = -1e30)
    logits = jnp.dot(h, w4_ref[...], preferred_element_type=jnp.float32) + b4_ref[...]

    # log_softmax over dim=1; padded columns contribute exp(-huge) == 0.
    m = jnp.max(logits, axis=-1, keepdims=True)
    z = logits - m
    lse = jnp.log(jnp.sum(jnp.exp(z), axis=-1, keepdims=True))
    out_ref[...] = z - lse


def _resident_spec(shape):
    nd = len(shape)
    return pl.BlockSpec(shape, lambda i: (0,) * nd)


def gcn_net_forward(a_norm, x, params, *, tm_max=256):
    """Forward pass.  params: w1..w4 (in,out) f32, b1..b4 (1,out) f32."""
    n, f = x.shape
    d1 = params["w1"].shape[1]
    c = params["w4"].shape[1]

    # ---- row tiling: TM rows per grid step (multiple of 8 sublanes) ----
    tm = min(tm_max, n)
    tm = -(-tm // 8) * 8
    n_pad = -(-n // tm) * tm

    # ---- lane-dense epilogue: pad classes to a multiple of 128 lanes ----
    c_pad = max(128, -(-c // 128) * 128)
    w4 = params["w4"].astype(jnp.float32)
    b4 = params["b4"].astype(jnp.float32)
    if c_pad != c:
        w4 = jnp.zeros((w4.shape[0], c_pad), jnp.float32).at[:, :c].set(w4)
        b4 = jnp.full((1, c_pad), -1e30, jnp.float32).at[:, :c].set(b4)

    # bf16 adjacency feeds the MXU (f32 accumulation inside the kernel).
    a = a_norm.astype(jnp.bfloat16)
    if n_pad != n:
        a = jnp.zeros((n_pad, n), jnp.bfloat16).at[:n, :].set(a)

    operands = (a, x.astype(jnp.float32),
                params["w1"], params["b1"],
                params["w2"], params["b2"],
                params["w3"], params["b3"],
                w4, b4)

    in_specs = [pl.BlockSpec((tm, n), lambda i: (i, 0)),   # adjacency rows (tiled)
                _resident_spec((n, f))]                    # full X resident
    in_specs += [_resident_spec(op.shape) for op in operands[2:]]
    out_specs = pl.BlockSpec((tm, c_pad), lambda i: (i, 0))

    # ---- VMEM budget (sized for v7x's 64 MiB; double-buffered tiles) ----
    weights_bytes = sum(int(op.size) * 4 for op in operands[2:])
    vmem_need = (2 * tm * n * 2            # A tile, bf16, double-buffered
                 + 2 * tm * c_pad * 4      # output tile, f32, double-buffered
                 + n * f * 4               # resident X
                 + weights_bytes)
    vmem_limit = int(min(48 * 1024 * 1024, max(16 * 1024 * 1024, 2 * vmem_need)))

    # ---- advisory cost hint ----
    flops = (2.0 * n_pad * n * min(f, d1)              # aggregation matmul
             + 2.0 * n_pad * f * d1                    # feature transform
             + 2.0 * n_pad * (d1 * 32 + 32 * 16 + 16 * c_pad))
    bytes_accessed = (a.size * 2 + n * f * 4 + weights_bytes + n_pad * c_pad * 4)
    cost = pl.CostEstimate(flops=int(flops),
                           transcendentals=int(n_pad * (c_pad + 1)),
                           bytes_accessed=int(bytes_accessed))

    out = pl.pallas_call(
        gcn_mlp_kernel,
        out_shape=jax.ShapeDtypeStruct((n_pad, c_pad), jnp.float32),
        grid=(n_pad // tm,),
        in_specs=in_specs,
        out_specs=out_specs,
        compiler_params=pltpu.CompilerParams(
            dimension_semantics=("parallel",),
            vmem_limit_bytes=vmem_limit),
        cost_estimate=cost,
    )(*operands)
    return out[:n, :c]


def build_normalized_adjacency(edge_index, edge_weight, num_nodes):
    """Dense equivalent of PyG gcn_norm with add_self_loops=True (plain-JAX glue).

    # TODO(synk): for large sparse graphs (E << N^2) replace the dense A with a
    # scalar-prefetch CSR gather / segment-sum kernel instead of an N x N matmul.
    """
    row, col = edge_index[0], edge_index[1]
    loop = jnp.arange(num_nodes, dtype=edge_index.dtype)
    row = jnp.concatenate([row, loop])
    col = jnp.concatenate([col, loop])
    w = jnp.concatenate([edge_weight,
                         jnp.ones((num_nodes,), dtype=edge_weight.dtype)])
    deg = jnp.zeros((num_nodes,), dtype=jnp.float32).at[col].add(w)
    deg_inv_sqrt = jnp.where(deg > 0, jax.lax.rsqrt(deg), 0.0)
    norm = deg_inv_sqrt[row] * w * deg_inv_sqrt[col]
    # aggregation at target nodes: out[col] += norm * x[row]  =>  A[col, row]
    a = jnp.zeros((num_nodes, num_nodes), dtype=jnp.float32).at[col, row].add(norm)
    return a


def init_params(key, num_features, num_classes):
    dims = [(num_features, 64), (64, 32), (32, 16), (16, num_classes)]
    params = {}
    for i, (fi, fo) in enumerate(dims, start=1):
        key, kw, kb = jax.random.split(key, 3)
        scale = 1.0 / jnp.sqrt(jnp.float32(fi))
        params[f"w{i}"] = (jax.random.uniform(kw, (fi, fo), jnp.float32,
                                              minval=-1.0, maxval=1.0) * scale)
        params[f"b{i}"] = (jax.random.uniform(kb, (1, fo), jnp.float32,
                                              minval=-1.0, maxval=1.0) * scale)
    return params


def reference_forward(a_norm, x, params):
    """Plain-JAX f32 reference matching the PyTorch module."""
    h = a_norm @ (x @ params["w1"]) + params["b1"]
    h = jnp.maximum(h, 0.0)
    h = jnp.maximum(h @ params["w2"] + params["b2"], 0.0)
    h = jnp.maximum(h @ params["w3"] + params["b3"], 0.0)
    logits = h @ params["w4"] + params["b4"]
    return jax.nn.log_softmax(logits, axis=-1)


if __name__ == "__main__":
    num_nodes = 128
    num_features = 32
    num_classes = 8
    num_edges = 512

    key = jax.random.PRNGKey(0)
    kx, ke_src, ke_dst, kw, kp = jax.random.split(key, 5)

    x = jax.random.normal(kx, (num_nodes, num_features), jnp.float32)
    edge_index = jnp.stack([
        jax.random.randint(ke_src, (num_edges,), 0, num_nodes),
        jax.random.randint(ke_dst, (num_edges,), 0, num_nodes),
    ]).astype(jnp.int32)
    # mirrors `edges_weight = data.edges_weight / 100`
    edges_weight = jax.random.uniform(kw, (num_edges,), jnp.float32) / 100.0

    params = init_params(kp, num_features, num_classes)
    a_norm = build_normalized_adjacency(edge_index, edges_weight, num_nodes)

    out = gcn_net_forward(a_norm, x, params)
    out = jax.block_until_ready(out)

    assert out.shape == (num_nodes, num_classes)
    # log_softmax rows must sum (in prob space) to ~1
    assert jnp.allclose(jnp.sum(jnp.exp(out), axis=1), 1.0, atol=1e-4)
    # matches the f32 reference (bf16 aggregation -> loose tolerance)
    ref = reference_forward(a_norm, x, params)
    assert jnp.allclose(out, ref, atol=0.1, rtol=0.1)
    print("KERNEL_OK")
</pallas_src>

<mosaic_0001>
module attributes {stable_mosaic.version = 11 : i64} {
  func.func @gcn_mlp_kernel(%arg0: i32, %arg1: memref<128x128xbf16, #tpu.memory_space<vmem>>, %arg2: memref<128x32xf32, #tpu.memory_space<vmem>>, %arg3: memref<32x64xf32, #tpu.memory_space<vmem>>, %arg4: memref<1x64xf32, #tpu.memory_space<vmem>>, %arg5: memref<64x32xf32, #tpu.memory_space<vmem>>, %arg6: memref<1x32xf32, #tpu.memory_space<vmem>>, %arg7: memref<32x16xf32, #tpu.memory_space<vmem>>, %arg8: memref<1x16xf32, #tpu.memory_space<vmem>>, %arg9: memref<16x128xf32, #tpu.memory_space<vmem>>, %arg10: memref<1x128xf32, #tpu.memory_space<vmem>>, %arg11: memref<128x128xf32, #tpu.memory_space<vmem>>) attributes {dimension_semantics = [#tpu.dimension_semantics<parallel>], iteration_bounds = array<i64: 1>, scalar_prefetch = 0 : i64, scratch_operands = 0 : i64, tpu.core_type = #tpu.core_type<tc>, window_params = [{transform_indices = @transform_0, window_bounds = array<i64: 128, 128>}, {pipeline_mode = #tpu.pipeline_mode<synchronous>, transform_indices = @transform_1, window_bounds = array<i64: 128, 32>}, {pipeline_mode = #tpu.pipeline_mode<synchronous>, transform_indices = @transform_2, window_bounds = array<i64: 32, 64>}, {pipeline_mode = #tpu.pipeline_mode<synchronous>, transform_indices = @transform_3, window_bounds = array<i64: 1, 64>}, {pipeline_mode = #tpu.pipeline_mode<synchronous>, transform_indices = @transform_4, window_bounds = array<i64: 64, 32>}, {pipeline_mode = #tpu.pipeline_mode<synchronous>, transform_indices = @transform_5, window_bounds = array<i64: 1, 32>}, {pipeline_mode = #tpu.pipeline_mode<synchronous>, transform_indices = @transform_6, window_bounds = array<i64: 32, 16>}, {pipeline_mode = #tpu.pipeline_mode<synchronous>, transform_indices = @transform_7, window_bounds = array<i64: 1, 16>}, {pipeline_mode = #tpu.pipeline_mode<synchronous>, transform_indices = @transform_8, window_bounds = array<i64: 16, 128>}, {pipeline_mode = #tpu.pipeline_mode<synchronous>, transform_indices = @transform_9, window_bounds = array<i64: 1, 128>}, {transform_indices = @transform_10, window_bounds = array<i64: 128, 128>}]} {
    %c0 = arith.constant 0 : index
    %c0_0 = arith.constant 0 : index
    %0 = vector.load %arg1[%c0, %c0_0] : memref<128x128xbf16, #tpu.memory_space<vmem>>, vector<128x128xbf16>
    %c0_1 = arith.constant 0 : index
    %c0_2 = arith.constant 0 : index
    %1 = vector.load %arg2[%c0_1, %c0_2] : memref<128x32xf32, #tpu.memory_space<vmem>>, vector<128x32xf32>
    %2 = arith.truncf %1 : vector<128x32xf32> to vector<128x32xbf16>
    %cst = arith.constant dense<0.000000e+00> : vector<128x32xf32>
    %3 = tpu.matmul %0, %2, %cst {dimension_numbers = #tpu.dot_dimension_numbers<[1], [0], [0], [1], [0, 0, 1, 1], [], []>} : vector<128x128xbf16>, vector<128x32xbf16>, vector<128x32xf32> -> vector<128x32xf32>
    %c0_3 = arith.constant 0 : index
    %c0_4 = arith.constant 0 : index
    %4 = vector.load %arg3[%c0_3, %c0_4] : memref<32x64xf32, #tpu.memory_space<vmem>>, vector<32x64xf32>
    %cst_5 = arith.constant dense<0.000000e+00> : vector<128x64xf32>
    %5 = tpu.matmul %3, %4, %cst_5 {dimension_numbers = #tpu.dot_dimension_numbers<[1], [0], [0], [1], [0, 0, 1, 1], [], []>} : vector<128x32xf32>, vector<32x64xf32>, vector<128x64xf32> -> vector<128x64xf32>
    %c0_6 = arith.constant 0 : index
    %c0_7 = arith.constant 0 : index
    %6 = vector.load %arg4[%c0_6, %c0_7] : memref<1x64xf32, #tpu.memory_space<vmem>>, vector<1x64xf32>
    %7 = vector.broadcast %6 : vector<1x64xf32> to vector<128x64xf32>
    %8 = arith.addf %5, %7 : vector<128x64xf32>
    %cst_8 = arith.constant 0.000000e+00 : f32
    %9 = vector.broadcast %cst_8 : f32 to vector<128x64xf32>
    %10 = arith.maximumf %8, %9 : vector<128x64xf32>
    %c0_9 = arith.constant 0 : index
    %c0_10 = arith.constant 0 : index
    %11 = vector.load %arg5[%c0_9, %c0_10] : memref<64x32xf32, #tpu.memory_space<vmem>>, vector<64x32xf32>
    %cst_11 = arith.constant dense<0.000000e+00> : vector<128x32xf32>
    %12 = tpu.matmul %10, %11, %cst_11 {dimension_numbers = #tpu.dot_dimension_numbers<[1], [0], [0], [1], [0, 0, 1, 1], [], []>} : vector<128x64xf32>, vector<64x32xf32>, vector<128x32xf32> -> vector<128x32xf32>
    %c0_12 = arith.constant 0 : index
    %c0_13 = arith.constant 0 : index
    %13 = vector.load %arg6[%c0_12, %c0_13] : memref<1x32xf32, #tpu.memory_space<vmem>>, vector<1x32xf32>
    %14 = vector.broadcast %13 : vector<1x32xf32> to vector<128x32xf32>
    %15 = arith.addf %12, %14 : vector<128x32xf32>
    %cst_14 = arith.constant 0.000000e+00 : f32
    %16 = vector.broadcast %cst_14 : f32 to vector<128x32xf32>
    %17 = arith.maximumf %15, %16 : vector<128x32xf32>
    %c0_15 = arith.constant 0 : index
    %c0_16 = arith.constant 0 : index
    %18 = vector.load %arg7[%c0_15, %c0_16] : memref<32x16xf32, #tpu.memory_space<vmem>>, vector<32x16xf32>
    %cst_17 = arith.constant dense<0.000000e+00> : vector<128x16xf32>
    %19 = tpu.matmul %17, %18, %cst_17 {dimension_numbers = #tpu.dot_dimension_numbers<[1], [0], [0], [1], [0, 0, 1, 1], [], []>} : vector<128x32xf32>, vector<32x16xf32>, vector<128x16xf32> -> vector<128x16xf32>
    %c0_18 = arith.constant 0 : index
    %c0_19 = arith.constant 0 : index
    %20 = vector.load %arg8[%c0_18, %c0_19] : memref<1x16xf32, #tpu.memory_space<vmem>>, vector<1x16xf32>
    %21 = vector.broadcast %20 : vector<1x16xf32> to vector<128x16xf32>
    %22 = arith.addf %19, %21 : vector<128x16xf32>
    %cst_20 = arith.constant 0.000000e+00 : f32
    %23 = vector.broadcast %cst_20 : f32 to vector<128x16xf32>
    %24 = arith.maximumf %22, %23 : vector<128x16xf32>
    %c0_21 = arith.constant 0 : index
    %c0_22 = arith.constant 0 : index
    %25 = vector.load %arg9[%c0_21, %c0_22] : memref<16x128xf32, #tpu.memory_space<vmem>>, vector<16x128xf32>
    %cst_23 = arith.constant dense<0.000000e+00> : vector<128x128xf32>
    %26 = tpu.matmul %24, %25, %cst_23 {dimension_numbers = #tpu.dot_dimension_numbers<[1], [0], [0], [1], [0, 0, 1, 1], [], []>} : vector<128x16xf32>, vector<16x128xf32>, vector<128x128xf32> -> vector<128x128xf32>
    %c0_24 = arith.constant 0 : index
    %c0_25 = arith.constant 0 : index
    %27 = vector.load %arg10[%c0_24, %c0_25] : memref<1x128xf32, #tpu.memory_space<vmem>>, vector<1x128xf32>
    %28 = vector.broadcast %27 : vector<1x128xf32> to vector<128x128xf32>
    %29 = arith.addf %26, %28 : vector<128x128xf32>
    %cst_26 = arith.constant dense<0xFF800000> : vector<128xf32>
    %30 = vector.multi_reduction <maximumf>, %29, %cst_26 [1] : vector<128x128xf32> to vector<128xf32>
    %31 = vector.shape_cast %30 : vector<128xf32> to vector<128x1xf32>
    %32 = vector.broadcast %31 : vector<128x1xf32> to vector<128x128xf32>
    %33 = arith.subf %29, %32 : vector<128x128xf32>
    %34 = math.exp %33 : vector<128x128xf32>
    %cst_27 = arith.constant dense<0.000000e+00> : vector<128xf32>
    %35 = vector.multi_reduction <add>, %34, %cst_27 [1] : vector<128x128xf32> to vector<128xf32>
    %36 = vector.shape_cast %35 : vector<128xf32> to vector<128x1xf32>
    %37 = math.log %36 : vector<128x1xf32>
    %38 = vector.broadcast %37 : vector<128x1xf32> to vector<128x128xf32>
    %39 = arith.subf %33, %38 : vector<128x128xf32>
    %c0_28 = arith.constant 0 : index
    %c0_29 = arith.constant 0 : index
    %40 = vector.load %arg11[%c0_28, %c0_29] : memref<128x128xf32, #tpu.memory_space<vmem>>, vector<128x128xf32>
    tpu.vector_store %arg11[%c0_28, %c0_29], %39 {strides = array<i32>} : memref<128x128xf32, #tpu.memory_space<vmem>>, vector<128x128xf32>,
    return
  }
  func.func @transform_0(%arg0: i32) -> (i32, i32) {
    %c0_i32 = arith.constant 0 : i32
    %c0_i32_0 = arith.constant 0 : i32
    return %arg0, %c0_i32 : i32, i32
  }
  func.func @transform_1(%arg0: i32) -> (i32, i32) {
    %c0_i32 = arith.constant 0 : i32
    %c0_i32_0 = arith.constant 0 : i32
    %c0_i32_1 = arith.constant 0 : i32
    return %c0_i32, %c0_i32_0 : i32, i32
  }
  func.func @transform_2(%arg0: i32) -> (i32, i32) {
    %c0_i32 = arith.constant 0 : i32
    %c0_i32_0 = arith.constant 0 : i32
    %c0_i32_1 = arith.constant 0 : i32
    return %c0_i32, %c0_i32_0 : i32, i32
  }
  func.func @transform_3(%arg0: i32) -> (i32, i32) {
    %c0_i32 = arith.constant 0 : i32
    %c0_i32_0 = arith.constant 0 : i32
    %c0_i32_1 = arith.constant 0 : i32
    return %c0_i32, %c0_i32_0 : i32, i32
  }
  func.func @transform_4(%arg0: i32) -> (i32, i32) {
    %c0_i32 = arith.constant 0 : i32
    %c0_i32_0 = arith.constant 0 : i32
    %c0_i32_1 = arith.constant 0 : i32
    return %c0_i32, %c0_i32_0 : i32, i32
  }
  func.func @transform_5(%arg0: i32) -> (i32, i32) {
    %c0_i32 = arith.constant 0 : i32
    %c0_i32_0 = arith.constant 0 : i32
    %c0_i32_1 = arith.constant 0 : i32
    return %c0_i32, %c0_i32_0 : i32, i32
  }
  func.func @transform_6(%arg0: i32) -> (i32, i32) {
    %c0_i32 = arith.constant 0 : i32
    %c0_i32_0 = arith.constant 0 : i32
    %c0_i32_1 = arith.constant 0 : i32
    return %c0_i32, %c0_i32_0 : i32, i32
  }
  func.func @transform_7(%arg0: i32) -> (i32, i32) {
    %c0_i32 = arith.constant 0 : i32
    %c0_i32_0 = arith.constant 0 : i32
    %c0_i32_1 = arith.constant 0 : i32
    return %c0_i32, %c0_i32_0 : i32, i32
  }
  func.func @transform_8(%arg0: i32) -> (i32, i32) {
    %c0_i32 = arith.constant 0 : i32
    %c0_i32_0 = arith.constant 0 : i32
    %c0_i32_1 = arith.constant 0 : i32
    return %c0_i32, %c0_i32_0 : i32, i32
  }
  func.func @transform_9(%arg0: i32) -> (i32, i32) {
    %c0_i32 = arith.constant 0 : i32
    %c0_i32_0 = arith.constant 0 : i32
    %c0_i32_1 = arith.constant 0 : i32
    return %c0_i32, %c0_i32_0 : i32, i32
  }
  func.func @transform_10(%arg0: i32) -> (i32, i32) {
    %c0_i32 = arith.constant 0 : i32
    %c0_i32_0 = arith.constant 0 : i32
    return %arg0, %c0_i32 : i32, i32
  }
}

</mosaic_0001>

<llo_original>
// kernel: tpu_custom_call.1
$region0: #{tpu_custom_call.1}
  #allocation0 [shape = 'u32[]', space=smem, size = 0x4, offset = 0x4, fixed_abs, tag = 'smem constant byte address 0x4 - core index']
  #allocation1 [shape = 'u32[144,128]{1,0:T(1,128)}', space=vmem, size = 0x12000, scoped, tag = 'internal scratch']
  %s0 = inlined_call_operand.vmem [shape: bf16[128,128], index: 0, kind: input, shape index: {}]
  %s1 = inlined_call_operand.vmem [shape: f32[128,32], index: 1, kind: input, shape index: {}]
  %s2 = inlined_call_operand.vmem [shape: f32[32,64], index: 2, kind: input, shape index: {}]
  %s3 = inlined_call_operand.vmem [shape: f32[1,64], index: 3, kind: input, shape index: {}]
  %s4 = inlined_call_operand.vmem [shape: f32[64,32], index: 4, kind: input, shape index: {}]
  %s5 = inlined_call_operand.vmem [shape: f32[1,32], index: 5, kind: input, shape index: {}]
  %s6 = inlined_call_operand.vmem [shape: f32[32,16], index: 6, kind: input, shape index: {}]
  %s7 = inlined_call_operand.vmem [shape: f32[1,16], index: 7, kind: input, shape index: {}]
  %s8 = inlined_call_operand.vmem [shape: f32[16,128], index: 8, kind: input, shape index: {}]
  %s9 = inlined_call_operand.vmem [shape: f32[1,128], index: 9, kind: input, shape index: {}]
  %s10 = inlined_call_operand.hbm [shape: f32[128,128], index: 10, kind: output, shape index: {}]
  %s11 = sld [smem:[#allocation0]]
  $region50: #{tpu_custom_call.1} parent=0
    _
  %s13 = ssub.s32 1, %s11
  %s14 = scalar_select 0, %s13, %s11
  $region1: #{tpu_custom_call.1} parent=0
    #allocation2 [shape = 'u8[65536]{0}', space=vmem, size = 0x10000, scoped, tag = 'output window, operand 0, single buffered']
    #allocation3 [shape = 's32[1]{0}', space=sflag, size = 0x4, scoped, tag = 'scoped memory for tpu_custom_call.1']
    %15 = vsyncpa [#allocation3], 0
    // Predicated region
    $region2: #{tpu_custom_call.1} parent=1 // pred_check
      _
    $region3: #{tpu_custom_call.1} parent=1 // pred_check_branch
      %17 = sbr.rel (0) target = $region5
    $region4: #{tpu_custom_call.1} parent=1 // pred_region
      _
    $region5: #{tpu_custom_call.1} parent=1 // pred_fallthru
      _
    // Predicated region
    $region6: #{tpu_custom_call.1} parent=1 // pred_check
      _
    $region7: #{tpu_custom_call.1} parent=1 // pred_check_branch
      %19 = sbr.rel (0) target = $region9
    $region8: #{tpu_custom_call.1} parent=1 // pred_region
      _
    $region9: #{tpu_custom_call.1} parent=1 // pred_fallthru
      _
    // Predicated region
    $region10: #{tpu_custom_call.1} parent=1 // pred_check
      _
    $region11: #{tpu_custom_call.1} parent=1 // pred_check_branch
      %21 = sbr.rel (0) target = $region13
    $region12: #{tpu_custom_call.1} parent=1 // pred_region
      _
    $region13: #{tpu_custom_call.1} parent=1 // pred_fallthru
      _
    // Predicated region
    $region14: #{tpu_custom_call.1} parent=1 // pred_check
      _
    $region15: #{tpu_custom_call.1} parent=1 // pred_check_branch
      %23 = sbr.rel (0) target = $region17
    $region16: #{tpu_custom_call.1} parent=1 // pred_region
      _
    $region17: #{tpu_custom_call.1} parent=1 // pred_fallthru
      _
    // Predicated region
    $region18: #{tpu_custom_call.1} parent=1 // pred_check
      _
    $region19: #{tpu_custom_call.1} parent=1 // pred_check_branch
      %25 = sbr.rel (0) target = $region21
    $region20: #{tpu_custom_call.1} parent=1 // pred_region
      _
    $region21: #{tpu_custom_call.1} parent=1 // pred_fallthru
      _
    // Predicated region
    $region22: #{tpu_custom_call.1} parent=1 // pred_check
      _
    $region23: #{tpu_custom_call.1} parent=1 // pred_check_branch
      %27 = sbr.rel (0) target = $region25
    $region24: #{tpu_custom_call.1} parent=1 // pred_region
      _
    $region25: #{tpu_custom_call.1} parent=1 // pred_fallthru
      _
    // Predicated region
    $region26: #{tpu_custom_call.1} parent=1 // pred_check
      _
    $region27: #{tpu_custom_call.1} parent=1 // pred_check_branch
      %29 = sbr.rel (0) target = $region29
    $region28: #{tpu_custom_call.1} parent=1 // pred_region
      _
    $region29: #{tpu_custom_call.1} parent=1 // pred_fallthru
      _
    // Predicated region
    $region30: #{tpu_custom_call.1} parent=1 // pred_check
      _
    $region31: #{tpu_custom_call.1} parent=1 // pred_check_branch
      %31 = sbr.rel (0) target = $region33
    $region32: #{tpu_custom_call.1} parent=1 // pred_region
      _
    $region33: #{tpu_custom_call.1} parent=1 // pred_fallthru
      _
    // Predicated region
    $region34: #{tpu_custom_call.1} parent=1 // pred_check
      _
    $region35: #{tpu_custom_call.1} parent=1 // pred_check_branch
      %33 = sbr.rel (0) target = $region37
    $region36: #{tpu_custom_call.1} parent=1 // pred_region
      _
    $region37: #{tpu_custom_call.1} parent=1 // pred_fallthru
      _
    // Predicated region
    $region38: #{tpu_custom_call.1} parent=1 // pred_check
      _
    $region39: #{tpu_custom_call.1} parent=1 // pred_check_branch
      %35 = sbr.rel (0) target = $region41
    $region40: #{tpu_custom_call.1} parent=1 // pred_region
      _
    $region41: #{tpu_custom_call.1} parent=1 // pred_fallthru
      _
    %v37 = vld [vmem:[%s0] sm:$0xf]
    %v38 = vld [vmem:[%s0 + $0x4] sm:$0xf]
    %v39 = vld [vmem:[%s0 + $0x8] sm:$0xf]
    %v40 = vld [vmem:[%s0 + $0xc] sm:$0xf]
    %v41 = vld [vmem:[%s0 + $0x10] sm:$0xf]
    %v42 = vld [vmem:[%s0 + $0x14] sm:$0xf]
    %v43 = vld [vmem:[%s0 + $0x18] sm:$0xf]
    %v44 = vld [vmem:[%s0 + $0x1c] sm:$0xf]
    %v45 = vld [vmem:[%s0 + $0x20] sm:$0xf]
    %v46 = vld [vmem:[%s0 + $0x24] sm:$0xf]
    %v47 = vld [vmem:[%s0 + $0x28] sm:$0xf]
    %v48 = vld [vmem:[%s0 + $0x2c] sm:$0xf]
    %v49 = vld [vmem:[%s0 + $0x30] sm:$0xf]
    %v50 = vld [vmem:[%s0 + $0x34] sm:$0xf]
    %v51 = vld [vmem:[%s0 + $0x38] sm:$0xf]
    %v52 = vld [vmem:[%s0 + $0x3c] sm:$0xf]
    %v53 = vld [vmem:[%s1] sm:$0xff]
    %v54 = vld [vmem:[%s1 + $0x8] sm:$0xff]
    %v55 = vld [vmem:[%s1 + $0x10] sm:$0xff]
    %v56 = vld [vmem:[%s1 + $0x18] sm:$0xff]
    %v57 = vld [vmem:[%s1 + $0x20] sm:$0xff]
    %v58 = vld [vmem:[%s1 + $0x28] sm:$0xff]
    %v59 = vld [vmem:[%s1 + $0x30] sm:$0xff]
    %v60 = vld [vmem:[%s1 + $0x38] sm:$0xff]
    %v61 = vld [vmem:[%s1 + $0x40] sm:$0xff]
    %v62 = vld [vmem:[%s1 + $0x48] sm:$0xff]
    %v63 = vld [vmem:[%s1 + $0x50] sm:$0xff]
    %v64 = vld [vmem:[%s1 + $0x58] sm:$0xff]
    %v65 = vld [vmem:[%s1 + $0x60] sm:$0xff]
    %v66 = vld [vmem:[%s1 + $0x68] sm:$0xff]
    %v67 = vld [vmem:[%s1 + $0x70] sm:$0xff]
    %v68 = vld [vmem:[%s1 + $0x78] sm:$0xff]
    %v69 = vpack.c.bf16 %v54, %v53
    %v70 = vpack.c.bf16 %v56, %v55
    %v71 = vpack.c.bf16 %v58, %v57
    %v72 = vpack.c.bf16 %v60, %v59
    %v73 = vpack.c.bf16 %v62, %v61
    %v74 = vpack.c.bf16 %v64, %v63
    %v75 = vpack.c.bf16 %v66, %v65
    %v76 = vpack.c.bf16 %v68, %v67
    %v93 = vunpack.c.l.b16 %v37
    %v94 = vunpack.c.l.b16 %v38
    %v95 = vunpack.c.l.b16 %v39
    %v96 = vunpack.c.l.b16 %v40
    %v97 = vunpack.c.l.b16 %v41
    %v98 = vunpack.c.l.b16 %v42
    %v99 = vunpack.c.l.b16 %v43
    %v100 = vunpack.c.l.b16 %v44
    %v101 = vunpack.c.l.b16 %v45
    %v102 = vunpack.c.l.b16 %v46
    %v103 = vunpack.c.l.b16 %v47
    %v104 = vunpack.c.l.b16 %v48
    %v105 = vunpack.c.l.b16 %v49
    %v106 = vunpack.c.l.b16 %v50
    %v107 = vunpack.c.l.b16 %v51
    %v108 = vunpack.c.l.b16 %v52
    %v109 = vpack.c.b16 %v94, %v93
    %v110 = vpack.c.b16 %v96, %v95
    %v111 = vpack.c.b16 %v98, %v97
    %v112 = vpack.c.b16 %v100, %v99
    %v113 = vpack.c.b16 %v102, %v101
    %v114 = vpack.c.b16 %v104, %v103
    %v115 = vpack.c.b16 %v106, %v105
    %v116 = vpack.c.b16 %v108, %v107
    %125 = vmatprep.subr.bf16.mxu0 0
    %126 = vmatpush1.bf16.msra.mxu0 %v69
    %127 = vmatprep.subr.bf16.mxu0 0
    %128 = vmatpush1.bf16.msra.mxu0 %v70
    %129 = vmatprep.subr.bf16.mxu0 0
    %130 = vmatpush1.bf16.msra.mxu0 %v71
    %131 = vmatprep.subr.bf16.mxu0 0
    %132 = vmatpush1.bf16.msra.mxu0 %v72
    %133 = vmatprep.subr.bf16.mxu0 0
    %134 = vmatpush1.bf16.msra.mxu0 %v73
    %135 = vmatprep.subr.bf16.mxu0 0
    %136 = vmatpush1.bf16.msra.mxu0 %v74
    %137 = vmatprep.subr.bf16.mxu0 0
    %138 = vmatpush1.bf16.msra.mxu0 %v75
    %139 = vmatprep.subr.bf16.mxu0 0
    %140 = vmatpush1.bf16.msra.mxu0 %v76
    %141 = vmatprep.subr.bf16.mxu0 0
    %142 = vmatpush1.bf16.msra.mxu0 0
    %143 = vmatprep.subr.bf16.mxu0 0
    %144 = vmatpush1.bf16.msra.mxu0 0
    %145 = vmatprep.subr.bf16.mxu0 0
    %146 = vmatpush1.bf16.msra.mxu0 0
    %147 = vmatprep.subr.bf16.mxu0 0
    %148 = vmatpush1.bf16.msra.mxu0 0
    %149 = vmatprep.subr.bf16.mxu0 0
    %150 = vmatpush1.bf16.msra.mxu0 0
    %151 = vmatprep.subr.bf16.mxu0 0
    %152 = vmatpush1.bf16.msra.mxu0 0
    %153 = vmatprep.subr.bf16.mxu0 0
    %154 = vmatpush1.bf16.msra.mxu0 0
    %155 = vmatprep.subr.bf16.mxu0 0
    %156 = vmatpush1.bf16.msra.mxu0 0
    %157 = vmatprep.mubr.bf16.mxu0 0
    %158 = vmatmul.mubr.bf16.gmra.mrb[0].mxu0 %v109
    %v159 = vpop.f32.mrb[0].mxu0
    %v160 = vadd.f32 0.0, %v159
    %v161 = vpop.f32.mrb[0].mxu0
    %v162 = vpop.f32.mrb[0].mxu0
    %v163 = vadd.f32 0.0, %v162
    %v164 = vpop.f32.mrb[0].mxu0
    %165 = vmatprep.mubr.bf16.mxu0 0
    %166 = vmatmul.mubr.bf16.gmra.mrb[0].mxu0 %v110
    %v167 = vpop.f32.mrb[0].mxu0
    %v168 = vadd.f32 0.0, %v167
    %v169 = vpop.f32.mrb[0].mxu0
    %v170 = vpop.f32.mrb[0].mxu0
    %v171 = vadd.f32 0.0, %v170
    %v172 = vpop.f32.mrb[0].mxu0
    %173 = vmatprep.mubr.bf16.mxu0 0
    %174 = vmatmul.mubr.bf16.gmra.mrb[0].mxu0 %v111
    %v175 = vpop.f32.mrb[0].mxu0
    %v176 = vadd.f32 0.0, %v175
    %v177 = vpop.f32.mrb[0].mxu0
    %v178 = vpop.f32.mrb[0].mxu0
    %v179 = vadd.f32 0.0, %v178
    %v180 = vpop.f32.mrb[0].mxu0
    %181 = vmatprep.mubr.bf16.mxu0 0
    %182 = vmatmul.mubr.bf16.gmra.mrb[0].mxu0 %v112
    %v183 = vpop.f32.mrb[0].mxu0
    %v184 = vadd.f32 0.0, %v183
    %v185 = vpop.f32.mrb[0].mxu0
    %v186 = vpop.f32.mrb[0].mxu0
    %v187 = vadd.f32 0.0, %v186
    %v188 = vpop.f32.mrb[0].mxu0
    %189 = vmatprep.mubr.bf16.mxu0 0
    %190 = vmatmul.mubr.bf16.gmra.mrb[0].mxu0 %v113
    %v191 = vpop.f32.mrb[0].mxu0
    %v192 = vadd.f32 0.0, %v191
    %v193 = vpop.f32.mrb[0].mxu0
    %v194 = vpop.f32.mrb[0].mxu0
    %v195 = vadd.f32 0.0, %v194
    %v196 = vpop.f32.mrb[0].mxu0
    %197 = vmatprep.mubr.bf16.mxu0 0
    %198 = vmatmul.mubr.bf16.gmra.mrb[0].mxu0 %v114
    %v199 = vpop.f32.mrb[0].mxu0
    %v200 = vadd.f32 0.0, %v199
    %v201 = vpop.f32.mrb[0].mxu0
    %v202 = vpop.f32.mrb[0].mxu0
    %v203 = vadd.f32 0.0, %v202
    %v204 = vpop.f32.mrb[0].mxu0
    %205 = vmatprep.mubr.bf16.mxu0 0
    %206 = vmatmul.mubr.bf16.gmra.mrb[0].mxu0 %v115
    %v207 = vpop.f32.mrb[0].mxu0
    %v208 = vadd.f32 0.0, %v207
    %v209 = vpop.f32.mrb[0].mxu0
    %v210 = vpop.f32.mrb[0].mxu0
    %v211 = vadd.f32 0.0, %v210
    %v212 = vpop.f32.mrb[0].mxu0
    %213 = vmatprep.mubr.bf16.mxu0 0
    %214 = vmatmul.mubr.bf16.gmra.mrb[0].mxu0 %v116
    %v215 = vpop.f32.mrb[0].mxu0
    %v216 = vadd.f32 0.0, %v215
    %v217 = vpop.f32.mrb[0].mxu0
    %v218 = vpop.f32.mrb[0].mxu0
    %v219 = vadd.f32 0.0, %v218
    %v220 = vpop.f32.mrb[0].mxu0
    %221 = vdwg.mxu0
    %v222 = vld [vmem:[%s2] sm:$0xff]
    %v223 = vld [vmem:[%s2 + $0x8] sm:$0xff]
    %v224 = vld [vmem:[%s2 + $0x10] sm:$0xff]
    %v225 = vld [vmem:[%s2 + $0x18] sm:$0xff]
    %v226 = vld [vmem:[%s3] sm:$0x1]
    %v228 = vlaneseq
    %v229 = vshrl.u32 %v228, 7
    %v230 = vsub.s32 0, %v229
    %v231 = vrot.slane %v226, %v230
    %vm233 = vcmask 261120
    %v235 = vsel %vm233, %v160, 0
    %v238 = vsel %vm233, %v163, 0
    %v241 = vsel %vm233, %v168, 0
    %v244 = vsel %vm233, %v171, 0
    %v247 = vsel %vm233, %v176, 0
    %v250 = vsel %vm233, %v179, 0
    %v253 = vsel %vm233, %v184, 0
    %v256 = vsel %vm233, %v187, 0
    %v259 = vsel %vm233, %v192, 0
    %v262 = vsel %vm233, %v195, 0
    %v265 = vsel %vm233, %v200, 0
    %v268 = vsel %vm233, %v203, 0
    %v271 = vsel %vm233, %v208, 0
    %v274 = vsel %vm233, %v211, 0
    %v277 = vsel %vm233, %v216, 0
    %v280 = vsel %vm233, %v219, 0
    %282 = vmatprep.subr.mxu0 0.0
    %283 = vmatpush1.msra.mxu0 %v222
    %284 = vmatprep.subr.mxu0 0.0
    %285 = vmatpush1.msra.mxu0 %v223
    %286 = vmatprep.subr.mxu0 0.0
    %287 = vmatpush1.msra.mxu0 %v224
    %288 = vmatprep.subr.mxu0 0.0
    %289 = vmatpush1.msra.mxu0 %v225
    %290 = vmatprep.subr.mxu0 0.0
    %291 = vmatpush1.msra.mxu0 0.0
    %292 = vmatprep.subr.mxu0 0.0
    %293 = vmatpush1.msra.mxu0 0.0
    %294 = vmatprep.subr.mxu0 0.0
    %295 = vmatpush1.msra.mxu0 0.0
    %296 = vmatprep.subr.mxu0 0.0
    %297 = vmatpush1.msra.mxu0 0.0
    %298 = vmatprep.subr.mxu0 0.0
    %299 = vmatpush1.msra.mxu0 0.0
    %300 = vmatprep.subr.mxu0 0.0
    %301 = vmatpush1.msra.mxu0 0.0
    %302 = vmatprep.subr.mxu0 0.0
    %303 = vmatpush1.msra.mxu0 0.0
    %304 = vmatprep.subr.mxu0 0.0
    %305 = vmatpush1.msra.mxu0 0.0
    %306 = vmatprep.subr.mxu0 0.0
    %307 = vmatpush1.msra.mxu0 0.0
    %308 = vmatprep.subr.mxu0 0.0
    %309 = vmatpush1.msra.mxu0 0.0
    %310 = vmatprep.subr.mxu0 0.0
    %311 = vmatpush1.msra.mxu0 0.0
    %312 = vmatprep.subr.mxu0 0.0
    %313 = vmatpush1.msra.mxu0 0.0
    %314 = vmatprep.subr.mxu0 0.0
    %315 = vmatpush1.msra.mxu0 0.0
    %316 = vmatprep.subr.mxu0 0.0
    %317 = vmatpush1.msra.mxu0 0.0
    %318 = vmatprep.subr.mxu0 0.0
    %319 = vmatpush1.msra.mxu0 0.0
    %320 = vmatprep.subr.mxu0 0.0
    %321 = vmatpush1.msra.mxu0 0.0
    %322 = vmatprep.subr.mxu0 0.0
    %323 = vmatpush1.msra.mxu0 0.0
    %324 = vmatprep.subr.mxu0 0.0
    %325 = vmatpush1.msra.mxu0 0.0
    %326 = vmatprep.subr.mxu0 0.0
    %327 = vmatpush1.msra.mxu0 0.0
    %328 = vmatprep.subr.mxu0 0.0
    %329 = vmatpush1.msra.mxu0 0.0
    %330 = vmatprep.subr.mxu0 0.0
    %331 = vmatpush1.msra.mxu0 0.0
    %332 = vmatprep.subr.mxu0 0.0
    %333 = vmatpush1.msra.mxu0 0.0
    %334 = vmatprep.subr.mxu0 0.0
    %335 = vmatpush1.msra.mxu0 0.0
    %336 = vmatprep.subr.mxu0 0.0
    %337 = vmatpush1.msra.mxu0 0.0
    %338 = vmatprep.subr.mxu0 0.0
    %339 = vmatpush1.msra.mxu0 0.0
    %340 = vmatprep.subr.mxu0 0.0
    %341 = vmatpush1.msra.mxu0 0.0
    %342 = vmatprep.subr.mxu0 0.0
    %343 = vmatpush1.msra.mxu0 0.0
    %344 = vmatprep.subr.mxu0 0.0
    %345 = vmatpush1.msra.mxu0 0.0
    %346 = vmatprep.mubr.f32.mxu0 0.0
    %347 = vmatmul.mubr.f32.gmra.mrb[0].mxu0 %v235
    %v348 = vpop.f32.mrb[0].mxu0
    %v349 = vadd.f32 %v231, %v348
    %v350 = vpop.f32.mrb[0].mxu0
    %351 = vmatprep.mubr.f32.mxu0 0.0
    %352 = vmatmul.mubr.f32.gmra.mrb[0].mxu0 %v238
    %v353 = vpop.f32.mrb[0].mxu0
    %v354 = vadd.f32 %v231, %v353
    %v355 = vpop.f32.mrb[0].mxu0
    %356 = vmatprep.mubr.f32.mxu0 0.0
    %357 = vmatmul.mubr.f32.gmra.mrb[0].mxu0 %v241
    %v358 = vpop.f32.mrb[0].mxu0
    %v359 = vadd.f32 %v231, %v358
    %v360 = vpop.f32.mrb[0].mxu0
    %361 = vmatprep.mubr.f32.mxu0 0.0
    %362 = vmatmul.mubr.f32.gmra.mrb[0].mxu0 %v244
    %v363 = vpop.f32.mrb[0].mxu0
    %v364 = vadd.f32 %v231, %v363
    %v365 = vpop.f32.mrb[0].mxu0
    %366 = vmatprep.mubr.f32.mxu0 0.0
    %367 = vmatmul.mubr.f32.gmra.mrb[0].mxu0 %v247
    %v368 = vpop.f32.mrb[0].mxu0
    %v369 = vadd.f32 %v231, %v368
    %v370 = vpop.f32.mrb[0].mxu0
    %371 = vmatprep.mubr.f32.mxu0 0.0
    %372 = vmatmul.mubr.f32.gmra.mrb[0].mxu0 %v250
    %v373 = vpop.f32.mrb[0].mxu0
    %v374 = vadd.f32 %v231, %v373
    %v375 = vpop.f32.mrb[0].mxu0
    %376 = vmatprep.mubr.f32.mxu0 0.0
    %377 = vmatmul.mubr.f32.gmra.mrb[0].mxu0 %v253
    %v378 = vpop.f32.mrb[0].mxu0
    %v379 = vadd.f32 %v231, %v378
    %v380 = vpop.f32.mrb[0].mxu0
    %381 = vmatprep.mubr.f32.mxu0 0.0
    %382 = vmatmul.mubr.f32.gmra.mrb[0].mxu0 %v256
    %v383 = vpop.f32.mrb[0].mxu0
    %v384 = vadd.f32 %v231, %v383
    %v385 = vpop.f32.mrb[0].mxu0
    %386 = vmatprep.mubr.f32.mxu0 0.0
    %387 = vmatmul.mubr.f32.gmra.mrb[0].mxu0 %v259
    %v388 = vpop.f32.mrb[0].mxu0
    %v389 = vadd.f32 %v231, %v388
    %v390 = vpop.f32.mrb[0].mxu0
    %391 = vmatprep.mubr.f32.mxu0 0.0
    %392 = vmatmul.mubr.f32.gmra.mrb[0].mxu0 %v262
    %v393 = vpop.f32.mrb[0].mxu0
    %v394 = vadd.f32 %v231, %v393
    %v395 = vpop.f32.mrb[0].mxu0
    %396 = vmatprep.mubr.f32.mxu0 0.0
    %397 = vmatmul.mubr.f32.gmra.mrb[0].mxu0 %v265
    %v398 = vpop.f32.mrb[0].mxu0
    %v399 = vadd.f32 %v231, %v398
    %v400 = vpop.f32.mrb[0].mxu0
    %401 = vmatprep.mubr.f32.mxu0 0.0
    %402 = vmatmul.mubr.f32.gmra.mrb[0].mxu0 %v268
    %v403 = vpop.f32.mrb[0].mxu0
    %v404 = vadd.f32 %v231, %v403
    %v405 = vpop.f32.mrb[0].mxu0
    %406 = vmatprep.mubr.f32.mxu0 0.0
    %407 = vmatmul.mubr.f32.gmra.mrb[0].mxu0 %v271
    %v408 = vpop.f32.mrb[0].mxu0
    %v409 = vadd.f32 %v231, %v408
    %v410 = vpop.f32.mrb[0].mxu0
    %411 = vmatprep.mubr.f32.mxu0 0.0
    %412 = vmatmul.mubr.f32.gmra.mrb[0].mxu0 %v274
    %v413 = vpop.f32.mrb[0].mxu0
    %v414 = vadd.f32 %v231, %v413
    %v415 = vpop.f32.mrb[0].mxu0
    %416 = vmatprep.mubr.f32.mxu0 0.0
    %417 = vmatmul.mubr.f32.gmra.mrb[0].mxu0 %v277
    %v418 = vpop.f32.mrb[0].mxu0
    %v419 = vadd.f32 %v231, %v418
    %v420 = vpop.f32.mrb[0].mxu0
    %421 = vmatprep.mubr.f32.mxu0 0.0
    %422 = vmatmul.mubr.f32.gmra.mrb[0].mxu0 %v280
    %v423 = vpop.f32.mrb[0].mxu0
    %v424 = vadd.f32 %v231, %v423
    %v425 = vpop.f32.mrb[0].mxu0
    %426 = vdwg.mxu0
    %v427 = vmax.f32 %v349, 0.0
    %v428 = vmax.f32 %v354, 0.0
    %v429 = vmax.f32 %v359, 0.0
    %v430 = vmax.f32 %v364, 0.0
    %v431 = vmax.f32 %v369, 0.0
    %v432 = vmax.f32 %v374, 0.0
    %v433 = vmax.f32 %v379, 0.0
    %v434 = vmax.f32 %v384, 0.0
    %v435 = vmax.f32 %v389, 0.0
    %v436 = vmax.f32 %v394, 0.0
    %v437 = vmax.f32 %v399, 0.0
    %v438 = vmax.f32 %v404, 0.0
    %v439 = vmax.f32 %v409, 0.0
    %v440 = vmax.f32 %v414, 0.0
    %v441 = vmax.f32 %v419, 0.0
    %v442 = vmax.f32 %v424, 0.0
    %v443 = vld [vmem:[%s4] sm:$0xff]
    %v444 = vld [vmem:[%s4 + $0x8] sm:$0xff]
    %v445 = vld [vmem:[%s4 + $0x10] sm:$0xff]
    %v446 = vld [vmem:[%s4 + $0x18] sm:$0xff]
    %v447 = vld [vmem:[%s4 + $0x20] sm:$0xff]
    %v448 = vld [vmem:[%s4 + $0x28] sm:$0xff]
    %v449 = vld [vmem:[%s4 + $0x30] sm:$0xff]
    %v450 = vld [vmem:[%s4 + $0x38] sm:$0xff]
    %v451 = vld [vmem:[%s5] sm:$0x1]
    %v453 = vlaneseq
    %v454 = vshrl.u32 %v453, 7
    %v455 = vsub.s32 0, %v454
    %v456 = vrot.slane %v451, %v455
    %vm458 = vcmask 523264
    %v460 = vsel %vm458, %v427, 0
    %v463 = vsel %vm458, %v428, 0
    %v466 = vsel %vm458, %v429, 0
    %v469 = vsel %vm458, %v430, 0
    %v472 = vsel %vm458, %v431, 0
    %v475 = vsel %vm458, %v432, 0
    %v478 = vsel %vm458, %v433, 0
    %v481 = vsel %vm458, %v434, 0
    %v484 = vsel %vm458, %v435, 0
    %v487 = vsel %vm458, %v436, 0
    %v490 = vsel %vm458, %v437, 0
    %v493 = vsel %vm458, %v438, 0
    %v496 = vsel %vm458, %v439, 0
    %v499 = vsel %vm458, %v440, 0
    %v502 = vsel %vm458, %v441, 0
    %v505 = vsel %vm458, %v442, 0
    %507 = vmatprep.subr.mxu0 0.0
    %508 = vmatpush1.msra.mxu0 %v443
    %509 = vmatprep.subr.mxu0 0.0
    %510 = vmatpush1.msra.mxu0 %v444
    %511 = vmatprep.subr.mxu0 0.0
    %512 = vmatpush1.msra.mxu0 %v445
    %513 = vmatprep.subr.mxu0 0.0
    %514 = vmatpush1.msra.mxu0 %v446
    %515 = vmatprep.subr.mxu0 0.0
    %516 = vmatpush1.msra.mxu0 %v447
    %517 = vmatprep.subr.mxu0 0.0
    %518 = vmatpush1.msra.mxu0 %v448
    %519 = vmatprep.subr.mxu0 0.0
    %520 = vmatpush1.msra.mxu0 %v449
    %521 = vmatprep.subr.mxu0 0.0
    %522 = vmatpush1.msra.mxu0 %v450
    %523 = vmatprep.subr.mxu0 0.0
    %524 = vmatpush1.msra.mxu0 0.0
    %525 = vmatprep.subr.mxu0 0.0
    %526 = vmatpush1.msra.mxu0 0.0
    %527 = vmatprep.subr.mxu0 0.0
    %528 = vmatpush1.msra.mxu0 0.0
    %529 = vmatprep.subr.mxu0 0.0
    %530 = vmatpush1.msra.mxu0 0.0
    %531 = vmatprep.subr.mxu0 0.0
    %532 = vmatpush1.msra.mxu0 0.0
    %533 = vmatprep.subr.mxu0 0.0
    %534 = vmatpush1.msra.mxu0 0.0
    %535 = vmatprep.subr.mxu0 0.0
    %536 = vmatpush1.msra.mxu0 0.0
    %537 = vmatprep.subr.mxu0 0.0
    %538 = vmatpush1.msra.mxu0 0.0
    %539 = vmatprep.subr.mxu0 0.0
    %540 = vmatpush1.msra.mxu0 0.0
    %541 = vmatprep.subr.mxu0 0.0
    %542 = vmatpush1.msra.mxu0 0.0
    %543 = vmatprep.subr.mxu0 0.0
    %544 = vmatpush1.msra.mxu0 0.0
    %545 = vmatprep.subr.mxu0 0.0
    %546 = vmatpush1.msra.mxu0 0.0
    %547 = vmatprep.subr.mxu0 0.0
    %548 = vmatpush1.msra.mxu0 0.0
    %549 = vmatprep.subr.mxu0 0.0
    %550 = vmatpush1.msra.mxu0 0.0
    %551 = vmatprep.subr.mxu0 0.0
    %552 = vmatpush1.msra.mxu0 0.0
    %553 = vmatprep.subr.mxu0 0.0
    %554 = vmatpush1.msra.mxu0 0.0
    %555 = vmatprep.subr.mxu0 0.0
    %556 = vmatpush1.msra.mxu0 0.0
    %557 = vmatprep.subr.mxu0 0.0
    %558 = vmatpush1.msra.mxu0 0.0
    %559 = vmatprep.subr.mxu0 0.0
    %560 = vmatpush1.msra.mxu0 0.0
    %561 = vmatprep.subr.mxu0 0.0
    %562 = vmatpush1.msra.mxu0 0.0
    %563 = vmatprep.subr.mxu0 0.0
    %564 = vmatpush1.msra.mxu0 0.0
    %565 = vmatprep.subr.mxu0 0.0
    %566 = vmatpush1.msra.mxu0 0.0
    %567 = vmatprep.subr.mxu0 0.0
    %568 = vmatpush1.msra.mxu0 0.0
    %569 = vmatprep.subr.mxu0 0.0
    %570 = vmatpush1.msra.mxu0 0.0
    %571 = vmatprep.mubr.f32.mxu0 0.0
    %572 = vmatmul.mubr.f32.gmra.mrb[0].mxu0 %v460
    %v573 = vpop.f32.mrb[0].mxu0
    %v574 = vadd.f32 %v456, %v573
    %v575 = vpop.f32.mrb[0].mxu0
    %576 = vmatprep.mubr.f32.mxu0 0.0
    %577 = vmatmul.mubr.f32.gmra.mrb[0].mxu0 %v463
    %v578 = vpop.f32.mrb[0].mxu0
    %v579 = vadd.f32 %v456, %v578
    %v580 = vpop.f32.mrb[0].mxu0
    %581 = vmatprep.mubr.f32.mxu0 0.0
    %582 = vmatmul.mubr.f32.gmra.mrb[0].mxu0 %v466
    %v583 = vpop.f32.mrb[0].mxu0
    %v584 = vadd.f32 %v456, %v583
    %v585 = vpop.f32.mrb[0].mxu0
    %586 = vmatprep.mubr.f32.mxu0 0.0
    %587 = vmatmul.mubr.f32.gmra.mrb[0].mxu0 %v469
    %v588 = vpop.f32.mrb[0].mxu0
    %v589 = vadd.f32 %v456, %v588
    %v590 = vpop.f32.mrb[0].mxu0
    %591 = vmatprep.mubr.f32.mxu0 0.0
    %592 = vmatmul.mubr.f32.gmra.mrb[0].mxu0 %v472
    %v593 = vpop.f32.mrb[0].mxu0
    %v594 = vadd.f32 %v456, %v593
    %v595 = vpop.f32.mrb[0].mxu0
    %596 = vmatprep.mubr.f32.mxu0 0.0
    %597 = vmatmul.mubr.f32.gmra.mrb[0].mxu0 %v475
    %v598 = vpop.f32.mrb[0].mxu0
    %v599 = vadd.f32 %v456, %v598
    %v600 = vpop.f32.mrb[0].mxu0
    %601 = vmatprep.mubr.f32.mxu0 0.0
    %602 = vmatmul.mubr.f32.gmra.mrb[0].mxu0 %v478
    %v603 = vpop.f32.mrb[0].mxu0
    %v604 = vadd.f32 %v456, %v603
    %v605 = vpop.f32.mrb[0].mxu0
    %606 = vmatprep.mubr.f32.mxu0 0.0
    %607 = vmatmul.mubr.f32.gmra.mrb[0].mxu0 %v481
    %v608 = vpop.f32.mrb[0].mxu0
    %v609 = vadd.f32 %v456, %v608
    %v610 = vpop.f32.mrb[0].mxu0
    %611 = vmatprep.mubr.f32.mxu0 0.0
    %612 = vmatmul.mubr.f32.gmra.mrb[0].mxu0 %v484
    %v613 = vpop.f32.mrb[0].mxu0
    %v614 = vadd.f32 %v456, %v613
    %v615 = vpop.f32.mrb[0].mxu0
    %616 = vmatprep.mubr.f32.mxu0 0.0
    %617 = vmatmul.mubr.f32.gmra.mrb[0].mxu0 %v487
    %v618 = vpop.f32.mrb[0].mxu0
    %v619 = vadd.f32 %v456, %v618
    %v620 = vpop.f32.mrb[0].mxu0
    %621 = vmatprep.mubr.f32.mxu0 0.0
    %622 = vmatmul.mubr.f32.gmra.mrb[0].mxu0 %v490
    %v623 = vpop.f32.mrb[0].mxu0
    %v624 = vadd.f32 %v456, %v623
    %v625 = vpop.f32.mrb[0].mxu0
    %626 = vmatprep.mubr.f32.mxu0 0.0
    %627 = vmatmul.mubr.f32.gmra.mrb[0].mxu0 %v493
    %v628 = vpop.f32.mrb[0].mxu0
    %v629 = vadd.f32 %v456, %v628
    %v630 = vpop.f32.mrb[0].mxu0
    %631 = vmatprep.mubr.f32.mxu0 0.0
    %632 = vmatmul.mubr.f32.gmra.mrb[0].mxu0 %v496
    %v633 = vpop.f32.mrb[0].mxu0
    %v634 = vadd.f32 %v456, %v633
    %v635 = vpop.f32.mrb[0].mxu0
    %636 = vmatprep.mubr.f32.mxu0 0.0
    %637 = vmatmul.mubr.f32.gmra.mrb[0].mxu0 %v499
    %v638 = vpop.f32.mrb[0].mxu0
    %v639 = vadd.f32 %v456, %v638
    %v640 = vpop.f32.mrb[0].mxu0
    %641 = vmatprep.mubr.f32.mxu0 0.0
    %642 = vmatmul.mubr.f32.gmra.mrb[0].mxu0 %v502
    %v643 = vpop.f32.mrb[0].mxu0
    %v644 = vadd.f32 %v456, %v643
    %v645 = vpop.f32.mrb[0].mxu0
    %646 = vmatprep.mubr.f32.mxu0 0.0
    %647 = vmatmul.mubr.f32.gmra.mrb[0].mxu0 %v505
    %v648 = vpop.f32.mrb[0].mxu0
    %v649 = vadd.f32 %v456, %v648
    %v650 = vpop.f32.mrb[0].mxu0
    %651 = vdwg.mxu0
    %v652 = vmax.f32 %v574, 0.0
    %v653 = vmax.f32 %v579, 0.0
    %v654 = vmax.f32 %v584, 0.0
    %v655 = vmax.f32 %v589, 0.0
    %v656 = vmax.f32 %v594, 0.0
    %v657 = vmax.f32 %v599, 0.0
    %v658 = vmax.f32 %v604, 0.0
    %v659 = vmax.f32 %v609, 0.0
    %v660 = vmax.f32 %v614, 0.0
    %v661 = vmax.f32 %v619, 0.0
    %v662 = vmax.f32 %v624, 0.0
    %v663 = vmax.f32 %v629, 0.0
    %v664 = vmax.f32 %v634, 0.0
    %v665 = vmax.f32 %v639, 0.0
    %v666 = vmax.f32 %v644, 0.0
    %v667 = vmax.f32 %v649, 0.0
    %v668 = vld [vmem:[%s6] sm:$0xff]
    %v669 = vld [vmem:[%s6 + $0x8] sm:$0xff]
    %v670 = vld [vmem:[%s6 + $0x10] sm:$0xff]
    %v671 = vld [vmem:[%s6 + $0x18] sm:$0xff]
    %v672 = vld [vmem:[%s7] sm:$0x1]
    %v674 = vlaneseq
    %v675 = vshrl.u32 %v674, 7
    %v676 = vsub.s32 0, %v675
    %v677 = vrot.slane %v672, %v676
    %v680 = vsel %vm233, %v652, 0
    %v683 = vsel %vm233, %v653, 0
    %v686 = vsel %vm233, %v654, 0
    %v689 = vsel %vm233, %v655, 0
    %v692 = vsel %vm233, %v656, 0
    %v695 = vsel %vm233, %v657, 0
    %v698 = vsel %vm233, %v658, 0
    %v701 = vsel %vm233, %v659, 0
    %v704 = vsel %vm233, %v660, 0
    %v707 = vsel %vm233, %v661, 0
    %v710 = vsel %vm233, %v662, 0
    %v713 = vsel %vm233, %v663, 0
    %v716 = vsel %vm233, %v664, 0
    %v719 = vsel %vm233, %v665, 0
    %v722 = vsel %vm233, %v666, 0
    %v725 = vsel %vm233, %v667, 0
    %727 = vmatprep.subr.mxu0 0.0
    %728 = vmatpush1.msra.mxu0 %v668
    %729 = vmatprep.subr.mxu0 0.0
    %730 = vmatpush1.msra.mxu0 %v669
    %731 = vmatprep.subr.mxu0 0.0
    %732 = vmatpush1.msra.mxu0 %v670
    %733 = vmatprep.subr.mxu0 0.0
    %734 = vmatpush1.msra.mxu0 %v671
    %735 = vmatprep.subr.mxu0 0.0
    %736 = vmatpush1.msra.mxu0 0.0
    %737 = vmatprep.subr.mxu0 0.0
    %738 = vmatpush1.msra.mxu0 0.0
    %739 = vmatprep.subr.mxu0 0.0
    %740 = vmatpush1.msra.mxu0 0.0
    %741 = vmatprep.subr.mxu0 0.0
    %742 = vmatpush1.msra.mxu0 0.0
    %743 = vmatprep.subr.mxu0 0.0
    %744 = vmatpush1.msra.mxu0 0.0
    %745 = vmatprep.subr.mxu0 0.0
    %746 = vmatpush1.msra.mxu0 0.0
    %747 = vmatprep.subr.mxu0 0.0
    %748 = vmatpush1.msra.mxu0 0.0
    %749 = vmatprep.subr.mxu0 0.0
    %750 = vmatpush1.msra.mxu0 0.0
    %751 = vmatprep.subr.mxu0 0.0
    %752 = vmatpush1.msra.mxu0 0.0
    %753 = vmatprep.subr.mxu0 0.0
    %754 = vmatpush1.msra.mxu0 0.0
    %755 = vmatprep.subr.mxu0 0.0
    %756 = vmatpush1.msra.mxu0 0.0
    %757 = vmatprep.subr.mxu0 0.0
    %758 = vmatpush1.msra.mxu0 0.0
    %759 = vmatprep.subr.mxu0 0.0
    %760 = vmatpush1.msra.mxu0 0.0
    %761 = vmatprep.subr.mxu0 0.0
    %762 = vmatpush1.msra.mxu0 0.0
    %763 = vmatprep.subr.mxu0 0.0
    %764 = vmatpush1.msra.mxu0 0.0
    %765 = vmatprep.subr.mxu0 0.0
    %766 = vmatpush1.msra.mxu0 0.0
    %767 = vmatprep.subr.mxu0 0.0
    %768 = vmatpush1.msra.mxu0 0.0
    %769 = vmatprep.subr.mxu0 0.0
    %770 = vmatpush1.msra.mxu0 0.0
    %771 = vmatprep.subr.mxu0 0.0
    %772 = vmatpush1.msra.mxu0 0.0
    %773 = vmatprep.subr.mxu0 0.0
    %774 = vmatpush1.msra.mxu0 0.0
    %775 = vmatprep.subr.mxu0 0.0
    %776 = vmatpush1.msra.mxu0 0.0
    %777 = vmatprep.subr.mxu0 0.0
    %778 = vmatpush1.msra.mxu0 0.0
    %779 = vmatprep.subr.mxu0 0.0
    %780 = vmatpush1.msra.mxu0 0.0
    %781 = vmatprep.subr.mxu0 0.0
    %782 = vmatpush1.msra.mxu0 0.0
    %783 = vmatprep.subr.mxu0 0.0
    %784 = vmatpush1.msra.mxu0 0.0
    %785 = vmatprep.subr.mxu0 0.0
    %786 = vmatpush1.msra.mxu0 0.0
    %787 = vmatprep.subr.mxu0 0.0
    %788 = vmatpush1.msra.mxu0 0.0
    %789 = vmatprep.subr.mxu0 0.0
    %790 = vmatpush1.msra.mxu0 0.0
    %791 = vmatprep.mubr.f32.mxu0 0.0
    %792 = vmatmul.mubr.f32.gmra.mrb[0].mxu0 %v680
    %v793 = vpop.f32.mrb[0].mxu0
    %v794 = vadd.f32 %v677, %v793
    %v795 = vpop.f32.mrb[0].mxu0
    %796 = vmatprep.mubr.f32.mxu0 0.0
    %797 = vmatmul.mubr.f32.gmra.mrb[0].mxu0 %v683
    %v798 = vpop.f32.mrb[0].mxu0
    %v799 = vadd.f32 %v677, %v798
    %v800 = vpop.f32.mrb[0].mxu0
    %801 = vmatprep.mubr.f32.mxu0 0.0
    %802 = vmatmul.mubr.f32.gmra.mrb[0].mxu0 %v686
    %v803 = vpop.f32.mrb[0].mxu0
    %v804 = vadd.f32 %v677, %v803
    %v805 = vpop.f32.mrb[0].mxu0
    %806 = vmatprep.mubr.f32.mxu0 0.0
    %807 = vmatmul.mubr.f32.gmra.mrb[0].mxu0 %v689
    %v808 = vpop.f32.mrb[0].mxu0
    %v809 = vadd.f32 %v677, %v808
    %v810 = vpop.f32.mrb[0].mxu0
    %811 = vmatprep.mubr.f32.mxu0 0.0
    %812 = vmatmul.mubr.f32.gmra.mrb[0].mxu0 %v692
    %v813 = vpop.f32.mrb[0].mxu0
    %v814 = vadd.f32 %v677, %v813
    %v815 = vpop.f32.mrb[0].mxu0
    %816 = vmatprep.mubr.f32.mxu0 0.0
    %817 = vmatmul.mubr.f32.gmra.mrb[0].mxu0 %v695
    %v818 = vpop.f32.mrb[0].mxu0
    %v819 = vadd.f32 %v677, %v818
    %v820 = vpop.f32.mrb[0].mxu0
    %821 = vmatprep.mubr.f32.mxu0 0.0
    %822 = vmatmul.mubr.f32.gmra.mrb[0].mxu0 %v698
    %v823 = vpop.f32.mrb[0].mxu0
    %v824 = vadd.f32 %v677, %v823
    %v825 = vpop.f32.mrb[0].mxu0
    %826 = vmatprep.mubr.f32.mxu0 0.0
    %827 = vmatmul.mubr.f32.gmra.mrb[0].mxu0 %v701
    %v828 = vpop.f32.mrb[0].mxu0
    %v829 = vadd.f32 %v677, %v828
    %v830 = vpop.f32.mrb[0].mxu0
    %831 = vmatprep.mubr.f32.mxu0 0.0
    %832 = vmatmul.mubr.f32.gmra.mrb[0].mxu0 %v704
    %v833 = vpop.f32.mrb[0].mxu0
    %v834 = vadd.f32 %v677, %v833
    %v835 = vpop.f32.mrb[0].mxu0
    %836 = vmatprep.mubr.f32.mxu0 0.0
    %837 = vmatmul.mubr.f32.gmra.mrb[0].mxu0 %v707
    %v838 = vpop.f32.mrb[0].mxu0
    %v839 = vadd.f32 %v677, %v838
    %v840 = vpop.f32.mrb[0].mxu0
    %841 = vmatprep.mubr.f32.mxu0 0.0
    %842 = vmatmul.mubr.f32.gmra.mrb[0].mxu0 %v710
    %v843 = vpop.f32.mrb[0].mxu0
    %v844 = vadd.f32 %v677, %v843
    %v845 = vpop.f32.mrb[0].mxu0
    %846 = vmatprep.mubr.f32.mxu0 0.0
    %847 = vmatmul.mubr.f32.gmra.mrb[0].mxu0 %v713
    %v848 = vpop.f32.mrb[0].mxu0
    %v849 = vadd.f32 %v677, %v848
    %v850 = vpop.f32.mrb[0].mxu0
    %851 = vmatprep.mubr.f32.mxu0 0.0
    %852 = vmatmul.mubr.f32.gmra.mrb[0].mxu0 %v716
    %v853 = vpop.f32.mrb[0].mxu0
    %v854 = vadd.f32 %v677, %v853
    %v855 = vpop.f32.mrb[0].mxu0
    %856 = vmatprep.mubr.f32.mxu0 0.0
    %857 = vmatmul.mubr.f32.gmra.mrb[0].mxu0 %v719
    %v858 = vpop.f32.mrb[0].mxu0
    %v859 = vadd.f32 %v677, %v858
    %v860 = vpop.f32.mrb[0].mxu0
    %861 = vmatprep.mubr.f32.mxu0 0.0
    %862 = vmatmul.mubr.f32.gmra.mrb[0].mxu0 %v722
    %v863 = vpop.f32.mrb[0].mxu0
    %v864 = vadd.f32 %v677, %v863
    %v865 = vpop.f32.mrb[0].mxu0
    %866 = vmatprep.mubr.f32.mxu0 0.0
    %867 = vmatmul.mubr.f32.gmra.mrb[0].mxu0 %v725
    %v868 = vpop.f32.mrb[0].mxu0
    %v869 = vadd.f32 %v677, %v868
    %v870 = vpop.f32.mrb[0].mxu0
    %871 = vdwg.mxu0
    %v872 = vmax.f32 %v794, 0.0
    %v873 = vmax.f32 %v799, 0.0
    %v874 = vmax.f32 %v804, 0.0
    %v875 = vmax.f32 %v809, 0.0
    %v876 = vmax.f32 %v814, 0.0
    %v877 = vmax.f32 %v819, 0.0
    %v878 = vmax.f32 %v824, 0.0
    %v879 = vmax.f32 %v829, 0.0
    %v880 = vmax.f32 %v834, 0.0
    %v881 = vmax.f32 %v839, 0.0
    %v882 = vmax.f32 %v844, 0.0
    %v883 = vmax.f32 %v849, 0.0
    %v884 = vmax.f32 %v854, 0.0
    %v885 = vmax.f32 %v859, 0.0
    %v886 = vmax.f32 %v864, 0.0
    %v887 = vmax.f32 %v869, 0.0
    %v888 = vld [vmem:[%s8] sm:$0xff]
    %v889 = vld [vmem:[%s8 + $0x8] sm:$0xff]
    %v890 = vld [vmem:[%s9] sm:$0x1]
    %v892 = vlaneseq
    %v893 = vshrl.u32 %v892, 7
    %v894 = vsub.s32 0, %v893
    %v895 = vrot.slane %v890, %v894
    %vm897 = vcmask 130048
    %v899 = vsel %vm897, %v872, 0
    %v902 = vsel %vm897, %v873, 0
    %v905 = vsel %vm897, %v874, 0
    %v908 = vsel %vm897, %v875, 0
    %v911 = vsel %vm897, %v876, 0
    %v914 = vsel %vm897, %v877, 0
    %v917 = vsel %vm897, %v878, 0
    %v920 = vsel %vm897, %v879, 0
    %v923 = vsel %vm897, %v880, 0
    %v926 = vsel %vm897, %v881, 0
    %v929 = vsel %vm897, %v882, 0
    %v932 = vsel %vm897, %v883, 0
    %v935 = vsel %vm897, %v884, 0
    %v938 = vsel %vm897, %v885, 0
    %v941 = vsel %vm897, %v886, 0
    %v944 = vsel %vm897, %v887, 0
    %946 = vmatprep.subr.mxu0 0.0
    %947 = vmatpush1.msra.mxu0 %v888
    %948 = vmatprep.subr.mxu0 0.0
    %949 = vmatpush1.msra.mxu0 %v889
    %950 = vmatprep.subr.mxu0 0.0
    %951 = vmatpush1.msra.mxu0 0.0
    %952 = vmatprep.subr.mxu0 0.0
    %953 = vmatpush1.msra.mxu0 0.0
    %954 = vmatprep.subr.mxu0 0.0
    %955 = vmatpush1.msra.mxu0 0.0
    %956 = vmatprep.subr.mxu0 0.0
    %957 = vmatpush1.msra.mxu0 0.0
    %958 = vmatprep.subr.mxu0 0.0
    %959 = vmatpush1.msra.mxu0 0.0
    %960 = vmatprep.subr.mxu0 0.0
    %961 = vmatpush1.msra.mxu0 0.0
    %962 = vmatprep.subr.mxu0 0.0
    %963 = vmatpush1.msra.mxu0 0.0
    %964 = vmatprep.subr.mxu0 0.0
    %965 = vmatpush1.msra.mxu0 0.0
    %966 = vmatprep.subr.mxu0 0.0
    %967 = vmatpush1.msra.mxu0 0.0
    %968 = vmatprep.subr.mxu0 0.0
    %969 = vmatpush1.msra.mxu0 0.0
    %970 = vmatprep.subr.mxu0 0.0
    %971 = vmatpush1.msra.mxu0 0.0
    %972 = vmatprep.subr.mxu0 0.0
    %973 = vmatpush1.msra.mxu0 0.0
    %974 = vmatprep.subr.mxu0 0.0
    %975 = vmatpush1.msra.mxu0 0.0
    %976 = vmatprep.subr.mxu0 0.0
    %977 = vmatpush1.msra.mxu0 0.0
    %978 = vmatprep.subr.mxu0 0.0
    %979 = vmatpush1.msra.mxu0 0.0
    %980 = vmatprep.subr.mxu0 0.0
    %981 = vmatpush1.msra.mxu0 0.0
    %982 = vmatprep.subr.mxu0 0.0
    %983 = vmatpush1.msra.mxu0 0.0
    %984 = vmatprep.subr.mxu0 0.0
    %985 = vmatpush1.msra.mxu0 0.0
    %986 = vmatprep.subr.mxu0 0.0
    %987 = vmatpush1.msra.mxu0 0.0
    %988 = vmatprep.subr.mxu0 0.0
    %989 = vmatpush1.msra.mxu0 0.0
    %990 = vmatprep.subr.mxu0 0.0
    %991 = vmatpush1.msra.mxu0 0.0
    %992 = vmatprep.subr.mxu0 0.0
    %993 = vmatpush1.msra.mxu0 0.0
    %994 = vmatprep.subr.mxu0 0.0
    %995 = vmatpush1.msra.mxu0 0.0
    %996 = vmatprep.subr.mxu0 0.0
    %997 = vmatpush1.msra.mxu0 0.0
    %998 = vmatprep.subr.mxu0 0.0
    %999 = vmatpush1.msra.mxu0 0.0
    %1000 = vmatprep.subr.mxu0 0.0
    %1001 = vmatpush1.msra.mxu0 0.0
    %1002 = vmatprep.subr.mxu0 0.0
    %1003 = vmatpush1.msra.mxu0 0.0
    %1004 = vmatprep.subr.mxu0 0.0
    %1005 = vmatpush1.msra.mxu0 0.0
    %1006 = vmatprep.subr.mxu0 0.0
    %1007 = vmatpush1.msra.mxu0 0.0
    %1008 = vmatprep.subr.mxu0 0.0
    %1009 = vmatpush1.msra.mxu0 0.0
    %1010 = vmatprep.mubr.f32.mxu0 0.0
    %1011 = vmatmul.mubr.f32.gmra.mrb[0].mxu0 %v899
    %v1012 = vpop.f32.mrb[0].mxu0
    %v1013 = vadd.f32 %v895, %v1012
    %v1014 = vpop.f32.mrb[0].mxu0
    %1015 = vmatprep.mubr.f32.mxu0 0.0
    %1016 = vmatmul.mubr.f32.gmra.mrb[0].mxu0 %v902
    %v1017 = vpop.f32.mrb[0].mxu0
    %v1018 = vadd.f32 %v895, %v1017
    %v1019 = vpop.f32.mrb[0].mxu0
    %1020 = vmatprep.mubr.f32.mxu0 0.0
    %1021 = vmatmul.mubr.f32.gmra.mrb[0].mxu0 %v905
    %v1022 = vpop.f32.mrb[0].mxu0
    %v1023 = vadd.f32 %v895, %v1022
    %v1024 = vpop.f32.mrb[0].mxu0
    %1025 = vmatprep.mubr.f32.mxu0 0.0
    %1026 = vmatmul.mubr.f32.gmra.mrb[0].mxu0 %v908
    %v1027 = vpop.f32.mrb[0].mxu0
    %v1028 = vadd.f32 %v895, %v1027
    %v1029 = vpop.f32.mrb[0].mxu0
    %1030 = vmatprep.mubr.f32.mxu0 0.0
    %1031 = vmatmul.mubr.f32.gmra.mrb[0].mxu0 %v911
    %v1032 = vpop.f32.mrb[0].mxu0
    %v1033 = vadd.f32 %v895, %v1032
    %v1034 = vpop.f32.mrb[0].mxu0
    %1035 = vmatprep.mubr.f32.mxu0 0.0
    %1036 = vmatmul.mubr.f32.gmra.mrb[0].mxu0 %v914
    %v1037 = vpop.f32.mrb[0].mxu0
    %v1038 = vadd.f32 %v895, %v1037
    %v1039 = vpop.f32.mrb[0].mxu0
    %1040 = vmatprep.mubr.f32.mxu0 0.0
    %1041 = vmatmul.mubr.f32.gmra.mrb[0].mxu0 %v917
    %v1042 = vpop.f32.mrb[0].mxu0
    %v1043 = vadd.f32 %v895, %v1042
    %v1044 = vpop.f32.mrb[0].mxu0
    %1045 = vmatprep.mubr.f32.mxu0 0.0
    %1046 = vmatmul.mubr.f32.gmra.mrb[0].mxu0 %v920
    %v1047 = vpop.f32.mrb[0].mxu0
    %v1048 = vadd.f32 %v895, %v1047
    %v1049 = vpop.f32.mrb[0].mxu0
    %1050 = vmatprep.mubr.f32.mxu0 0.0
    %1051 = vmatmul.mubr.f32.gmra.mrb[0].mxu0 %v923
    %v1052 = vpop.f32.mrb[0].mxu0
    %v1053 = vadd.f32 %v895, %v1052
    %v1054 = vpop.f32.mrb[0].mxu0
    %1055 = vmatprep.mubr.f32.mxu0 0.0
    %1056 = vmatmul.mubr.f32.gmra.mrb[0].mxu0 %v926
    %v1057 = vpop.f32.mrb[0].mxu0
    %v1058 = vadd.f32 %v895, %v1057
    %v1059 = vpop.f32.mrb[0].mxu0
    %1060 = vmatprep.mubr.f32.mxu0 0.0
    %1061 = vmatmul.mubr.f32.gmra.mrb[0].mxu0 %v929
    %v1062 = vpop.f32.mrb[0].mxu0
    %v1063 = vadd.f32 %v895, %v1062
    %v1064 = vpop.f32.mrb[0].mxu0
    %1065 = vmatprep.mubr.f32.mxu0 0.0
    %1066 = vmatmul.mubr.f32.gmra.mrb[0].mxu0 %v932
    %v1067 = vpop.f32.mrb[0].mxu0
    %v1068 = vadd.f32 %v895, %v1067
    %v1069 = vpop.f32.mrb[0].mxu0
    %1070 = vmatprep.mubr.f32.mxu0 0.0
    %1071 = vmatmul.mubr.f32.gmra.mrb[0].mxu0 %v935
    %v1072 = vpop.f32.mrb[0].mxu0
    %v1073 = vadd.f32 %v895, %v1072
    %v1074 = vpop.f32.mrb[0].mxu0
    %1075 = vmatprep.mubr.f32.mxu0 0.0
    %1076 = vmatmul.mubr.f32.gmra.mrb[0].mxu0 %v938
    %v1077 = vpop.f32.mrb[0].mxu0
    %v1078 = vadd.f32 %v895, %v1077
    %v1079 = vpop.f32.mrb[0].mxu0
    %1080 = vmatprep.mubr.f32.mxu0 0.0
    %1081 = vmatmul.mubr.f32.gmra.mrb[0].mxu0 %v941
    %v1082 = vpop.f32.mrb[0].mxu0
    %v1083 = vadd.f32 %v895, %v1082
    %v1084 = vpop.f32.mrb[0].mxu0
    %1085 = vmatprep.mubr.f32.mxu0 0.0
    %1086 = vmatmul.mubr.f32.gmra.mrb[0].mxu0 %v944
    %v1087 = vpop.f32.mrb[0].mxu0
    %v1088 = vadd.f32 %v895, %v1087
    %v1089 = vpop.f32.mrb[0].mxu0
    %1090 = vdwg.mxu0
    %1091 = vmax.xlane.f32.xlu0 %v1013
    %v1092 = vpop.xlane.xlu0 %1091
    %1093 = vmax.xlane.f32.xlu0 %v1018
    %v1094 = vpop.xlane.xlu0 %1093
    %1095 = vmax.xlane.f32.xlu0 %v1023
    %v1096 = vpop.xlane.xlu0 %1095
    %1097 = vmax.xlane.f32.xlu0 %v1028
    %v1098 = vpop.xlane.xlu0 %1097
    %1099 = vmax.xlane.f32.xlu0 %v1033
    %v1100 = vpop.xlane.xlu0 %1099
    %1101 = vmax.xlane.f32.xlu0 %v1038
    %v1102 = vpop.xlane.xlu0 %1101
    %1103 = vmax.xlane.f32.xlu0 %v1043
    %v1104 = vpop.xlane.xlu0 %1103
    %1105 = vmax.xlane.f32.xlu0 %v1048
    %v1106 = vpop.xlane.xlu0 %1105
    %1107 = vmax.xlane.f32.xlu0 %v1053
    %v1108 = vpop.xlane.xlu0 %1107
    %1109 = vmax.xlane.f32.xlu0 %v1058
    %v1110 = vpop.xlane.xlu0 %1109
    %1111 = vmax.xlane.f32.xlu0 %v1063
    %v1112 = vpop.xlane.xlu0 %1111
    %1113 = vmax.xlane.f32.xlu0 %v1068
    %v1114 = vpop.xlane.xlu0 %1113
    %1115 = vmax.xlane.f32.xlu0 %v1073
    %v1116 = vpop.xlane.xlu0 %1115
    %1117 = vmax.xlane.f32.xlu0 %v1078
    %v1118 = vpop.xlane.xlu0 %1117
    %1119 = vmax.xlane.f32.xlu0 %v1083
    %v1120 = vpop.xlane.xlu0 %1119
    %1121 = vmax.xlane.f32.xlu0 %v1088
    %v1122 = vpop.xlane.xlu0 %1121
    %v1123 = vsub.f32 %v1013, %v1092
    %v1124 = vsub.f32 %v1018, %v1094
    %v1125 = vsub.f32 %v1023, %v1096
    %v1126 = vsub.f32 %v1028, %v1098
    %v1127 = vsub.f32 %v1033, %v1100
    %v1128 = vsub.f32 %v1038, %v1102
    %v1129 = vsub.f32 %v1043, %v1104
    %v1130 = vsub.f32 %v1048, %v1106
    %v1131 = vsub.f32 %v1053, %v1108
    %v1132 = vsub.f32 %v1058, %v1110
    %v1133 = vsub.f32 %v1063, %v1112
    %v1134 = vsub.f32 %v1068, %v1114
    %v1135 = vsub.f32 %v1073, %v1116
    %v1136 = vsub.f32 %v1078, %v1118
    %v1137 = vsub.f32 %v1083, %v1120
    %v1138 = vsub.f32 %v1088, %v1122
    %v1139 = vmul.f32 %v1123, 1.442695
    %v1140 = vpow.pop %v1139
    %v1141 = vmul.f32 %v1124, 1.442695
    %v1142 = vpow.pop %v1141
    %v1143 = vmul.f32 %v1125, 1.442695
    %v1144 = vpow.pop %v1143
    %v1145 = vmul.f32 %v1126, 1.442695
    %v1146 = vpow.pop %v1145
    %v1147 = vmul.f32 %v1127, 1.442695
    %v1148 = vpow.pop %v1147
    %v1149 = vmul.f32 %v1128, 1.442695
    %v1150 = vpow.pop %v1149
    %v1151 = vmul.f32 %v1129, 1.442695
    %v1152 = vpow.pop %v1151
    %v1153 = vmul.f32 %v1130, 1.442695
    %v1154 = vpow.pop %v1153
    %v1155 = vmul.f32 %v1131, 1.442695
    %v1156 = vpow.pop %v1155
    %v1157 = vmul.f32 %v1132, 1.442695
    %v1158 = vpow.pop %v1157
    %v1159 = vmul.f32 %v1133, 1.442695
    %v1160 = vpow.pop %v1159
    %v1161 = vmul.f32 %v1134, 1.442695
    %v1162 = vpow.pop %v1161
    %v1163 = vmul.f32 %v1135, 1.442695
    %v1164 = vpow.pop %v1163
    %v1165 = vmul.f32 %v1136, 1.442695
    %v1166 = vpow.pop %v1165
    %v1167 = vmul.f32 %v1137, 1.442695
    %v1168 = vpow.pop %v1167
    %v1169 = vmul.f32 %v1138, 1.442695
    %v1170 = vpow.pop %v1169
    %1171 = vadd.xlane.f32.xlu0 %v1140
    %v1172 = vpop.xlane.xlu0 %1171
    %1173 = vadd.xlane.f32.xlu0 %v1142
    %v1174 = vpop.xlane.xlu0 %1173
    %1175 = vadd.xlane.f32.xlu0 %v1144
    %v1176 = vpop.xlane.xlu0 %1175
    %1177 = vadd.xlane.f32.xlu0 %v1146
    %v1178 = vpop.xlane.xlu0 %1177
    %1179 = vadd.xlane.f32.xlu0 %v1148
    %v1180 = vpop.xlane.xlu0 %1179
    %1181 = vadd.xlane.f32.xlu0 %v1150
    %v1182 = vpop.xlane.xlu0 %1181
    %1183 = vadd.xlane.f32.xlu0 %v1152
    %v1184 = vpop.xlane.xlu0 %1183
    %1185 = vadd.xlane.f32.xlu0 %v1154
    %v1186 = vpop.xlane.xlu0 %1185
    %1187 = vadd.xlane.f32.xlu0 %v1156
    %v1188 = vpop.xlane.xlu0 %1187
    %1189 = vadd.xlane.f32.xlu0 %v1158
    %v1190 = vpop.xlane.xlu0 %1189
    %1191 = vadd.xlane.f32.xlu0 %v1160
    %v1192 = vpop.xlane.xlu0 %1191
    %1193 = vadd.xlane.f32.xlu0 %v1162
    %v1194 = vpop.xlane.xlu0 %1193
    %1195 = vadd.xlane.f32.xlu0 %v1164
    %v1196 = vpop.xlane.xlu0 %1195
    %1197 = vadd.xlane.f32.xlu0 %v1166
    %v1198 = vpop.xlane.xlu0 %1197
    %1199 = vadd.xlane.f32.xlu0 %v1168
    %v1200 = vpop.xlane.xlu0 %1199
    %1201 = vadd.xlane.f32.xlu0 %v1170
    %v1202 = vpop.xlane.xlu0 %1201
    %v1203 = vlog2.pop %v1172
    %v1204 = vmul.f32 %v1203, 0.6931472
    %v1205 = vlog2.pop %v1174
    %v1206 = vmul.f32 %v1205, 0.6931472
    %v1207 = vlog2.pop %v1176
    %v1208 = vmul.f32 %v1207, 0.6931472
    %v1209 = vlog2.pop %v1178
    %v1210 = vmul.f32 %v1209, 0.6931472
    %v1211 = vlog2.pop %v1180
    %v1212 = vmul.f32 %v1211, 0.6931472
    %v1213 = vlog2.pop %v1182
    %v1214 = vmul.f32 %v1213, 0.6931472
    %v1215 = vlog2.pop %v1184
    %v1216 = vmul.f32 %v1215, 0.6931472
    %v1217 = vlog2.pop %v1186
    %v1218 = vmul.f32 %v1217, 0.6931472
    %v1219 = vlog2.pop %v1188
    %v1220 = vmul.f32 %v1219, 0.6931472
    %v1221 = vlog2.pop %v1190
    %v1222 = vmul.f32 %v1221, 0.6931472
    %v1223 = vlog2.pop %v1192
    %v1224 = vmul.f32 %v1223, 0.6931472
    %v1225 = vlog2.pop %v1194
    %v1226 = vmul.f32 %v1225, 0.6931472
    %v1227 = vlog2.pop %v1196
    %v1228 = vmul.f32 %v1227, 0.6931472
    %v1229 = vlog2.pop %v1198
    %v1230 = vmul.f32 %v1229, 0.6931472
    %v1231 = vlog2.pop %v1200
    %v1232 = vmul.f32 %v1231, 0.6931472
    %v1233 = vlog2.pop %v1202
    %v1234 = vmul.f32 %v1233, 0.6931472
    %v1235 = vsub.f32 %v1123, %v1204
    %v1236 = vsub.f32 %v1124, %v1206
    %v1237 = vsub.f32 %v1125, %v1208
    %v1238 = vsub.f32 %v1126, %v1210
    %v1239 = vsub.f32 %v1127, %v1212
    %v1240 = vsub.f32 %v1128, %v1214
    %v1241 = vsub.f32 %v1129, %v1216
    %v1242 = vsub.f32 %v1130, %v1218
    %v1243 = vsub.f32 %v1131, %v1220
    %v1244 = vsub.f32 %v1132, %v1222
    %v1245 = vsub.f32 %v1133, %v1224
    %v1246 = vsub.f32 %v1134, %v1226
    %v1247 = vsub.f32 %v1135, %v1228
    %v1248 = vsub.f32 %v1136, %v1230
    %v1249 = vsub.f32 %v1137, %v1232
    %v1250 = vsub.f32 %v1138, %v1234
    %1251 = vst [vmem:[#allocation2] sm:$0xff] %v1235
    %1252 = vst [vmem:[#allocation2 + $0x8] sm:$0xff] %v1236
    %1253 = vst [vmem:[#allocation2 + $0x10] sm:$0xff] %v1237
    %1254 = vst [vmem:[#allocation2 + $0x18] sm:$0xff] %v1238
    %1255 = vst [vmem:[#allocation2 + $0x20] sm:$0xff] %v1239
    %1256 = vst [vmem:[#allocation2 + $0x28] sm:$0xff] %v1240
    %1257 = vst [vmem:[#allocation2 + $0x30] sm:$0xff] %v1241
    %1258 = vst [vmem:[#allocation2 + $0x38] sm:$0xff] %v1242
    %1259 = vst [vmem:[#allocation2 + $0x40] sm:$0xff] %v1243
    %1260 = vst [vmem:[#allocation2 + $0x48] sm:$0xff] %v1244
    %1261 = vst [vmem:[#allocation2 + $0x50] sm:$0xff] %v1245
    %1262 = vst [vmem:[#allocation2 + $0x58] sm:$0xff] %v1246
    %1263 = vst [vmem:[#allocation2 + $0x60] sm:$0xff] %v1247
    %1264 = vst [vmem:[#allocation2 + $0x68] sm:$0xff] %v1248
    %1265 = vst [vmem:[#allocation2 + $0x70] sm:$0xff] %v1249
    %1266 = vst [vmem:[#allocation2 + $0x78] sm:$0xff] %v1250
    // Predicated region
    $region42: #{tpu_custom_call.1} parent=1 // pred_check
      _
    $region43: #{tpu_custom_call.1} parent=1 // pred_check_branch
      %1268 = sbr.rel (0) target = $region45
    $region44: #{tpu_custom_call.1} parent=1 // pred_region
      %s1270 = ssub.s32 2048, 2048
      %1271 = vsyncadd [#allocation3], %s1270
      %s1272 = sshll.u32 [#allocation2], 4
      %s1273 = int_to_ptr.vmem [resolvable:$true] %s1272
      %1278 = dma.vmem_to_hbm [thread:$0]  %s1273, 2048, %s10, [#allocation3], 128, 128, 8
    $region45: #{tpu_custom_call.1} parent=1 // pred_fallthru
      _
    // Predicated region
    $region46: #{tpu_custom_call.1} parent=1 // pred_check
      _
    $region47: #{tpu_custom_call.1} parent=1 // pred_check_branch
      %1280 = sbr.rel (0) target = $region49
    $region48: #{tpu_custom_call.1} parent=1 // pred_region
      %1281 = dma.done [#allocation3], 2048
    $region49: #{tpu_custom_call.1} parent=1 // pred_fallthru
      _
    %1282 = vsyncpa [#allocation3], 1

</llo_original>
